<compile_context>
chip_gen: v7x
topology: tpu7x:2x2x1
jax: 0.10.0
libtpu: 0.0.40
codegen_flags: <defaults>
</compile_context>

<pallas_src>
import jax
import jax.numpy as jnp
from jax.experimental import pallas as pl
from jax.experimental.pallas import tpu as pltpu


LANE_W = 512                 # lanes per row: multiple of 128 -> dense DMAs, unmasked vst
MAX_TILE_ROWS = 2048         # 2048 x 512 f32 = 4 MiB per buffer
VMEM_LIMIT_BYTES = 40 * 1024 * 1024   # 4 buffers x 4 MiB << 40 MiB, < v7x 64 MiB VMEM


def _linear_kernel(w_ref, b_ref, x_ref, o_ref):
    # nn.Linear(1, 1): y = x @ W^T + b  ->  with in=out=1 this is y = x * w + b
    w = w_ref[0, 0]                         # scalar from SMEM
    b = b_ref[0, 0]                         # scalar from SMEM
    xv = x_ref[...].astype(jnp.float32)
    o_ref[...] = (xv * w + b).astype(o_ref.dtype)


def _choose_tile_rows(rows):
    """Rows per grid step: multiple of 8, <= MAX_TILE_ROWS, balanced so that
    grid_r >= 2 once there is enough work (both v7x TensorCores get a share)."""
    if rows <= 8:
        return rows                          # full-extent tiny block
    min_grid = 2 if rows > 16 else 1
    grid_target = max(min_grid, pl.cdiv(rows, MAX_TILE_ROWS))
    tile_r = pl.cdiv(pl.cdiv(rows, grid_target), 8) * 8
    return min(MAX_TILE_ROWS, tile_r)


def linear_1x1(x, weight, bias, *, min_pallas_elems=8192):
    """x: (..., 1), weight: (1, 1), bias: (1,) -> same shape as x."""
    orig_shape = x.shape
    assert orig_shape[-1] == 1, "nn.Linear(1, 1) expects last dim == 1"
    assert jnp.issubdtype(x.dtype, jnp.floating), "float inputs only (compute in f32)"

    n = x.size
    w32 = weight.reshape(1, 1).astype(jnp.float32)
    b32 = bias.reshape(1, 1).astype(jnp.float32)

    # Tiny inputs: fixed pallas_call launch cost dwarfs the work; a fused XLA
    # elementwise op is strictly faster. (Production could raise this toward
    # one full tile, ~1M elements, per the perf review.)
    if n < min_pallas_elems:
        y = x.astype(jnp.float32) * w32[0, 0] + b32[0, 0]
        return y.astype(x.dtype)

    flat = x.reshape(-1)                      # free: pure metadata reshape
    rows = pl.cdiv(n, LANE_W)
    padded_n = rows * LANE_W
    ragged = padded_n != n
    if ragged:
        # Pad by at most LANE_W - 1 elements; allow_input_fusion below lets XLA
        # fuse this pad + reshape into the Pallas operand read (no extra HBM pass).
        flat = jnp.pad(flat, (0, padded_n - n))
    slab = flat.reshape(rows, LANE_W)

    tile_r = _choose_tile_rows(rows)
    grid_r = pl.cdiv(rows, tile_r)            # partial last block handled by masking

    out_slab = pl.pallas_call(
        _linear_kernel,
        out_shape=jax.ShapeDtypeStruct((rows, LANE_W), x.dtype),
        grid=(grid_r,),
        in_specs=[
            pl.BlockSpec(memory_space=pltpu.MemorySpace.SMEM),   # weight scalar
            pl.BlockSpec(memory_space=pltpu.MemorySpace.SMEM),   # bias scalar
            pl.BlockSpec((tile_r, LANE_W), lambda i: (i, 0)),    # x slab tile
        ],
        out_specs=pl.BlockSpec((tile_r, LANE_W), lambda i: (i, 0)),
        compiler_params=pltpu.CompilerParams(
            dimension_semantics=("parallel",),
            vmem_limit_bytes=VMEM_LIMIT_BYTES,
            allow_input_fusion=[False, False, True],   # fuse pad/reshape into slab read
        ),
    )(w32, b32, slab)

    out_flat = out_slab.reshape(-1)           # free
    if ragged:
        out_flat = out_flat[:n]               # drops <= LANE_W - 1 padded elements
    return out_flat.reshape(orig_shape)       # free


if __name__ == "__main__":
    key = jax.random.PRNGKey(0)
    kx1, kx2, kx3, kw, kb = jax.random.split(key, 5)

    # Deterministic parameters (shapes from nn.Linear(1, 1)).
    weight = jax.random.uniform(kw, (1, 1), jnp.float32, minval=-1.0, maxval=1.0)
    bias = jax.random.uniform(kb, (1,), jnp.float32, minval=-1.0, maxval=1.0)

    def ref_fn(x):
        return x @ weight.T + bias            # plain-JAX reference

    # 1) tiny input -> plain-JAX fast path (pallas launch overhead not worth it)
    x_small = jax.random.normal(kx1, (8, 1), jnp.float32)
    # 2) lane-aligned input -> pure Pallas path, no pad/slice, grid split across 2 steps
    x_aligned = jax.random.normal(kx2, (64, 512, 1), jnp.float32)
    # 3) ragged input -> <512-element pad (fused into operand), masked last row-block
    x_ragged = jax.random.normal(kx3, (33333, 1), jnp.float32)

    for x in (x_small, x_aligned, x_ragged):
        out = jax.block_until_ready(linear_1x1(x, weight, bias))
        ref = ref_fn(x)
        assert out.shape == ref.shape
        assert jnp.allclose(out, ref, atol=1e-6), "mismatch vs reference"

    print("KERNEL_OK")
</pallas_src>

<mosaic_0001>
module attributes {stable_mosaic.version = 11 : i64} {
  func.func @_linear_kernel(%arg0: i32, %arg1: memref<1x1xf32, #tpu.memory_space<smem>>, %arg2: memref<1x1xf32, #tpu.memory_space<smem>>, %arg3: memref<32x512xf32, #tpu.memory_space<vmem>>, %arg4: memref<32x512xf32, #tpu.memory_space<vmem>>) attributes {dimension_semantics = [#tpu.dimension_semantics<parallel>], iteration_bounds = array<i64: 2>, scalar_prefetch = 0 : i64, scratch_operands = 0 : i64, tpu.core_type = #tpu.core_type<tc>, window_params = [{transform_indices = @transform_0, window_bounds = array<i64: 1, 1>}, {transform_indices = @transform_1, window_bounds = array<i64: 1, 1>}, {transform_indices = @transform_2, window_bounds = array<i64: 32, 512>}, {transform_indices = @transform_3, window_bounds = array<i64: 32, 512>}]} {
    %c0 = arith.constant 0 : index
    %c0_0 = arith.constant 0 : index
    %0 = memref.load %arg1[%c0, %c0_0] : memref<1x1xf32, #tpu.memory_space<smem>>
    %c0_1 = arith.constant 0 : index
    %c0_2 = arith.constant 0 : index
    %1 = memref.load %arg2[%c0_1, %c0_2] : memref<1x1xf32, #tpu.memory_space<smem>>
    %c0_3 = arith.constant 0 : index
    %c0_4 = arith.constant 0 : index
    %2 = vector.load %arg3[%c0_3, %c0_4] : memref<32x512xf32, #tpu.memory_space<vmem>>, vector<32x512xf32>
    %3 = vector.broadcast %0 : f32 to vector<32x512xf32>
    %4 = arith.mulf %2, %3 : vector<32x512xf32>
    %5 = vector.broadcast %1 : f32 to vector<32x512xf32>
    %6 = arith.addf %4, %5 : vector<32x512xf32>
    %c0_5 = arith.constant 0 : index
    %c0_6 = arith.constant 0 : index
    %7 = vector.load %arg4[%c0_5, %c0_6] : memref<32x512xf32, #tpu.memory_space<vmem>>, vector<32x512xf32>
    tpu.vector_store %arg4[%c0_5, %c0_6], %6 {strides = array<i32>} : memref<32x512xf32, #tpu.memory_space<vmem>>, vector<32x512xf32>,
    return
  }
  func.func @transform_0(%arg0: i32) -> (i32, i32) {
    %c0_i32 = arith.constant 0 : i32
    %c0_i32_0 = arith.constant 0 : i32
    %c0_i32_1 = arith.constant 0 : i32
    return %c0_i32, %c0_i32_0 : i32, i32
  }
  func.func @transform_1(%arg0: i32) -> (i32, i32) {
    %c0_i32 = arith.constant 0 : i32
    %c0_i32_0 = arith.constant 0 : i32
    %c0_i32_1 = arith.constant 0 : i32
    return %c0_i32, %c0_i32_0 : i32, i32
  }
  func.func @transform_2(%arg0: i32) -> (i32, i32) {
    %c0_i32 = arith.constant 0 : i32
    %c0_i32_0 = arith.constant 0 : i32
    return %arg0, %c0_i32 : i32, i32
  }
  func.func @transform_3(%arg0: i32) -> (i32, i32) {
    %c0_i32 = arith.constant 0 : i32
    %c0_i32_0 = arith.constant 0 : i32
    return %arg0, %c0_i32 : i32, i32
  }
}

</mosaic_0001>

<llo_original>
// kernel: tpu_custom_call.1
$region0: #{tpu_custom_call.1}
  #allocation0 [shape = 'u32[]', space=smem, size = 0x4, offset = 0x4, fixed_abs, tag = 'smem constant byte address 0x4 - core index']
  #allocation1 [shape = 'u32[144,128]{1,0:T(1,128)}', space=vmem, size = 0x12000, scoped, tag = 'internal scratch']
  #allocation2 [shape = 'f32[1,1]{1,0:T(1,128)S(6)}', space=smem, size = 0x200, scoped, tag = 'scoped memory for tpu_custom_call.1']
  #allocation3 [shape = 'f32[1,1]{1,0:T(1,128)S(6)}', space=smem, size = 0x200, scoped, tag = 'scoped memory for tpu_custom_call.1']
  %s0 = inlined_call_operand.<no memory space> [shape: f32[1,1], index: 0, kind: input, shape index: {}]
  %s1 = inlined_call_operand.<no memory space> [shape: f32[1,1], index: 1, kind: input, shape index: {}]
  %s2 = inlined_call_operand.hbm [shape: f32[64,512], index: 2, kind: input, shape index: {}]
  %s3 = inlined_call_operand.hbm [shape: f32[64,512], index: 3, kind: output, shape index: {}]
  %s4 = sld [smem:[#allocation0]]
  $region49: #{tpu_custom_call.1} parent=0
    _
  %s6 = ssub.s32 1, %s4
  %s7 = scalar_select 0, %s6, %s4
  %8 = sst [smem:[#allocation2]] %s0
  %9 = sst [smem:[#allocation3]] %s1
  $region1: #{tpu_custom_call.1} parent=0
    #allocation4 [shape = 'u8[131072]{0}', space=vmem, size = 0x20000, scoped, tag = 'input window, operand 2']
    #allocation5 [shape = 's32[2]{0}', space=sflag, size = 0x8, scoped, tag = 'scoped memory for tpu_custom_call.1']
    #allocation6 [shape = 's32[2]{0}', space=sflag, size = 0x8, scoped, tag = 'scoped memory for tpu_custom_call.1']
    #allocation7 [shape = 'u8[131072]{0}', space=vmem, size = 0x20000, scoped, tag = 'output window, operand 0']
    %10 = vsyncpa [#allocation5], 0
    %s11 = scalar_lea.sflag [#allocation5], 1
    %12 = vsyncpa %s11, 0
    %13 = vsyncpa [#allocation6], 0
    %s14 = scalar_lea.sflag [#allocation6], 1
    %15 = vsyncpa %s14, 0
    loop: start=0, step=1, limit=4
    $region2: #{tpu_custom_call.1} parent=1 // loop_pre_header
      _
    $region3: #{tpu_custom_call.1} parent=1 // loop_header
      %s17 = sphi 0, %s21
      %p18 = scmp.ge.s32.totalorder %s17, 4
      %s25 = sphi 0, %s25
      %s27 = sphi 0, %s25
      %s28 = sphi 0, %s27
      %s42 = sphi 0, %s28
      %s46 = sphi 0, %s46
      %s48 = sphi 0, %s46
      %s49 = sphi 0, %s48
      %s63 = sphi 0, %s49
      %s69 = sphi 0, %s71
      %s72 = sphi 0, %s69
      %s73 = sphi 0, %s72
      %s89 = sphi 0, %s73
      %s95 = sphi 0, %s97
      %s98 = sphi 0, %s95
      %s99 = sphi 0, %s98
      %s115 = sphi 0, %s99
    $region4: #{tpu_custom_call.1} parent=1 // loop_header_branch
      %20 = sbr.rel (%p18) target = $region8
    $region5: #{tpu_custom_call.1} parent=1 // loop_body
      %s22 = ssub.s32 %s17, 1
      %s23 = ssub.s32 %s17, 2
      %s24 = sadd.s32 %s17, 1
      %s26 = sadd.s32 %s25, 1
      %p29 = scmp.eq.s32.totalorder %s17, 1
      %p30 = scmp.ne.s32.totalorder %s25, %s27
      %p31 = scmp.eq.s32.totalorder %s17, 0
      %p32 = por %p30, %p31
      %p33 = scmp.ne.s32.totalorder %s25, %s27
      %p34 = scmp.eq.s32.totalorder %s22, 1
      %p35 = por %p33, %p34
      %p36 = scmp.ne.s32.totalorder %s27, %s28
      %p37 = scmp.eq.s32.totalorder %s22, 0
      %p38 = por %p36, %p37
      %p39 = scmp.ne.s32.totalorder %s27, %s28
      %p40 = scmp.eq.s32.totalorder %s23, 1
      %p41 = por %p39, %p40
      %p43 = scmp.ne.s32.totalorder %s28, %s42
      %p44 = scmp.eq.s32.totalorder %s23, 0
      %p45 = por %p43, %p44
      %s47 = sadd.s32 %s46, 1
      %p50 = scmp.eq.s32.totalorder %s17, 1
      %p51 = scmp.ne.s32.totalorder %s46, %s48
      %p52 = scmp.eq.s32.totalorder %s17, 0
      %p53 = por %p51, %p52
      %p54 = scmp.ne.s32.totalorder %s46, %s48
      %p55 = scmp.eq.s32.totalorder %s22, 1
      %p56 = por %p54, %p55
      %p57 = scmp.ne.s32.totalorder %s48, %s49
      %p58 = scmp.eq.s32.totalorder %s22, 0
      %p59 = por %p57, %p58
      %p60 = scmp.ne.s32.totalorder %s48, %s49
      %p61 = scmp.eq.s32.totalorder %s23, 1
      %p62 = por %p60, %p61
      %p64 = scmp.ne.s32.totalorder %s49, %s63
      %p65 = scmp.eq.s32.totalorder %s23, 0
      %p66 = por %p64, %p65
      %s67 = ssub.s32 %s17, %s24
      %p68 = scmp.eq.s32.totalorder %s67, 0
      %s70 = sadd.s32 %s69, 1
      %s71 = scalar_select %p68, %s69, %s70
      %p74 = pneg %p68
      %p75 = scmp.eq.s32.totalorder %s17, 1
      %p76 = por %p74, %p75
      %p77 = scmp.ne.s32.totalorder %s69, %s72
      %p78 = scmp.eq.s32.totalorder %s17, 0
      %p79 = por %p77, %p78
      %p80 = scmp.ne.s32.totalorder %s69, %s72
      %p81 = scmp.eq.s32.totalorder %s22, 1
      %p82 = por %p80, %p81
      %p83 = scmp.ne.s32.totalorder %s72, %s73
      %p84 = scmp.eq.s32.totalorder %s22, 0
      %p85 = por %p83, %p84
      %p86 = scmp.ne.s32.totalorder %s72, %s73
      %p87 = scmp.eq.s32.totalorder %s23, 1
      %p88 = por %p86, %p87
      %p90 = scmp.ne.s32.totalorder %s73, %s89
      %p91 = scmp.eq.s32.totalorder %s23, 0
      %p92 = por %p90, %p91
      %s93 = ssub.s32 %s17, %s24
      %p94 = scmp.eq.s32.totalorder %s93, 0
      %s96 = sadd.s32 %s95, 1
      %s97 = scalar_select %p94, %s95, %s96
      %p100 = pneg %p94
      %p101 = scmp.eq.s32.totalorder %s17, 1
      %p102 = por %p100, %p101
      %p103 = scmp.ne.s32.totalorder %s95, %s98
      %p104 = scmp.eq.s32.totalorder %s17, 0
      %p105 = por %p103, %p104
      %p106 = scmp.ne.s32.totalorder %s95, %s98
      %p107 = scmp.eq.s32.totalorder %s22, 1
      %p108 = por %p106, %p107
      %p109 = scmp.ne.s32.totalorder %s98, %s99
      %p110 = scmp.eq.s32.totalorder %s22, 0
      %p111 = por %p109, %p110
      %p112 = scmp.ne.s32.totalorder %s98, %s99
      %p113 = scmp.eq.s32.totalorder %s23, 1
      %p114 = por %p112, %p113
      %p116 = scmp.ne.s32.totalorder %s99, %s115
      %p117 = scmp.eq.s32.totalorder %s23, 0
      %p118 = por %p116, %p117
      %p119 = scmp.le.s32.totalorder 1, %s17
      %p120 = scmp.lt.s32.totalorder %s17, 3
      %p121 = pnand %p119, %p120
      %p122 = pneg %p121
      // Predicated region
      $region9: #{tpu_custom_call.1} parent=5 // pred_check
        _
      $region10: #{tpu_custom_call.1} parent=5 // pred_check_branch
        %124 = sbr.rel (%p121) target = $region12
      $region11: #{tpu_custom_call.1} parent=5 // pred_region
        %s125 = ssub.s32 %s17, 1
        // Predicated region
        $region13: #{tpu_custom_call.1} parent=11 // pred_check
          %p126 = pneg %p38
        $region14: #{tpu_custom_call.1} parent=11 // pred_check_branch
          %128 = sbr.rel (%p126) target = $region16
        $region15: #{tpu_custom_call.1} parent=11 // pred_region
          _
        $region16: #{tpu_custom_call.1} parent=11 // pred_fallthru
          _
        // Predicated region
        $region17: #{tpu_custom_call.1} parent=11 // pred_check
          %p129 = pneg %p59
        $region18: #{tpu_custom_call.1} parent=11 // pred_check_branch
          %131 = sbr.rel (%p129) target = $region20
        $region19: #{tpu_custom_call.1} parent=11 // pred_region
          _
        $region20: #{tpu_custom_call.1} parent=11 // pred_fallthru
          _
      $region12: #{tpu_custom_call.1} parent=5 // pred_fallthru
        _
      %p132 = scmp.lt.s32.totalorder %s17, 2
      // Predicated region
      $region21: #{tpu_custom_call.1} parent=5 // pred_check
        %p133 = pneg %p132
      $region22: #{tpu_custom_call.1} parent=5 // pred_check_branch
        %135 = sbr.rel (%p133) target = $region24
      $region23: #{tpu_custom_call.1} parent=5 // pred_region
        // Predicated region
        $region25: #{tpu_custom_call.1} parent=23 // pred_check
          %p136 = pneg %p79
        $region26: #{tpu_custom_call.1} parent=23 // pred_check_branch
          %138 = sbr.rel (%p136) target = $region28
        $region27: #{tpu_custom_call.1} parent=23 // pred_region
          %s139 = sand.u32 %s69, 1
          %s140 = scalar_lea.sflag [#allocation5], %s139
          %s141 = sand.u32 %s69, 1
          %s142 = smul.addr %s141, 128
          %s143 = scalar_lea.vmem [#allocation4], %s142
          %s144 = smul.u32 4, %s17
          %s146 = ssub.s32 2048, 2048
          %147 = vsyncadd %s140, %s146
          %s148 = smul.addr %s144, 4
          %s149 = smul.addr %s148, 128
          %s150 = scalar_lea.hbm %s2, %s149
          %s151 = sshll.u32 %s143, 4
          %s152 = int_to_ptr.vmem [resolvable:$true] %s151
          %157 = dma.hbm_to_vmem [thread:$0]  %s150, 2048, %s152, %s140, 512, 512, 32
        $region28: #{tpu_custom_call.1} parent=23 // pred_fallthru
          _
      $region24: #{tpu_custom_call.1} parent=5 // pred_fallthru
        _
      %p158 = scmp.le.s32.totalorder 1, %s17
      %p159 = scmp.lt.s32.totalorder %s17, 3
      %p160 = pnand %p158, %p159
      %p161 = pneg %p160
      // Predicated region
      $region29: #{tpu_custom_call.1} parent=5 // pred_check
        _
      $region30: #{tpu_custom_call.1} parent=5 // pred_check_branch
        %163 = sbr.rel (%p160) target = $region32
      $region31: #{tpu_custom_call.1} parent=5 // pred_region
        %s164 = ssub.s32 %s17, 1
        %s165 = sand.u32 %s72, 1
        %s166 = scalar_lea.sflag [#allocation5], %s165
        %s167 = sand.u32 %s72, 1
        %s168 = smul.addr %s167, 128
        %s169 = scalar_lea.vmem [#allocation4], %s168
        // Predicated region
        $region33: #{tpu_custom_call.1} parent=31 // pred_check
          %p170 = pneg %p85
        $region34: #{tpu_custom_call.1} parent=31 // pred_check_branch
          %172 = sbr.rel (%p170) target = $region36
        $region35: #{tpu_custom_call.1} parent=31 // pred_region
          %173 = dma.done %s166, 2048
        $region36: #{tpu_custom_call.1} parent=31 // pred_fallthru
          _
        %p174 = pneg %p38
        %p175 = pneg %p35
        %p176 = pneg %p59
        %p177 = pneg %p56
        %s178 = sand.u32 %s72, 1
        %s179 = scalar_lea.sflag [#allocation5], %s178
        %s180 = sand.u32 %s72, 1
        %s181 = smul.addr %s180, 128
        %s182 = scalar_lea.vmem [#allocation4], %s181
        %p183 = pneg %p85
        %p184 = pneg %p82
        %p185 = pneg %p111
        %p186 = pneg %p108
        %s187 = sand.u32 %s98, 1
        %s188 = scalar_lea.sflag [#allocation6], %s187
        %s189 = sand.u32 %s98, 1
        %s190 = smul.addr %s189, 128
        %s191 = scalar_lea.vmem [#allocation7], %s190
        %s192 = smul.u32 4, %s22
        %s193 = smul.u32 4, %s22
        %s194 = sld [smem:[#allocation2]]
        %s195 = sld [smem:[#allocation3]]
        %v196 = vld [vmem:[%s169] sm:$0xff]
        %v197 = vld [vmem:[%s169 + $0x8] sm:$0xff]
        %v198 = vld [vmem:[%s169 + $0x10] sm:$0xff]
        %v199 = vld [vmem:[%s169 + $0x18] sm:$0xff]
        %v200 = vld [vmem:[%s169 + $0x20] sm:$0xff]
        %v201 = vld [vmem:[%s169 + $0x28] sm:$0xff]
        %v202 = vld [vmem:[%s169 + $0x30] sm:$0xff]
        %v203 = vld [vmem:[%s169 + $0x38] sm:$0xff]
        %v204 = vld [vmem:[%s169 + $0x40] sm:$0xff]
        %v205 = vld [vmem:[%s169 + $0x48] sm:$0xff]
        %v206 = vld [vmem:[%s169 + $0x50] sm:$0xff]
        %v207 = vld [vmem:[%s169 + $0x58] sm:$0xff]
        %v208 = vld [vmem:[%s169 + $0x60] sm:$0xff]
        %v209 = vld [vmem:[%s169 + $0x68] sm:$0xff]
        %v210 = vld [vmem:[%s169 + $0x70] sm:$0xff]
        %v211 = vld [vmem:[%s169 + $0x78] sm:$0xff]
        %v212 = vstv %s194
        %v213 = vmul.f32 %v196, %v212
        %v214 = vmul.f32 %v197, %v212
        %v215 = vmul.f32 %v198, %v212
        %v216 = vmul.f32 %v199, %v212
        %v217 = vmul.f32 %v200, %v212
        %v218 = vmul.f32 %v201, %v212
        %v219 = vmul.f32 %v202, %v212
        %v220 = vmul.f32 %v203, %v212
        %v221 = vmul.f32 %v204, %v212
        %v222 = vmul.f32 %v205, %v212
        %v223 = vmul.f32 %v206, %v212
        %v224 = vmul.f32 %v207, %v212
        %v225 = vmul.f32 %v208, %v212
        %v226 = vmul.f32 %v209, %v212
        %v227 = vmul.f32 %v210, %v212
        %v228 = vmul.f32 %v211, %v212
        %v229 = vstv %s195
        %v230 = vadd.f32 %v213, %v229
        %v231 = vadd.f32 %v214, %v229
        %v232 = vadd.f32 %v215, %v229
        %v233 = vadd.f32 %v216, %v229
        %v234 = vadd.f32 %v217, %v229
        %v235 = vadd.f32 %v218, %v229
        %v236 = vadd.f32 %v219, %v229
        %v237 = vadd.f32 %v220, %v229
        %v238 = vadd.f32 %v221, %v229
        %v239 = vadd.f32 %v222, %v229
        %v240 = vadd.f32 %v223, %v229
        %v241 = vadd.f32 %v224, %v229
        %v242 = vadd.f32 %v225, %v229
        %v243 = vadd.f32 %v226, %v229
        %v244 = vadd.f32 %v227, %v229
        %v245 = vadd.f32 %v228, %v229
        %246 = vst [vmem:[%s191] sm:$0xff] %v230
        %247 = vst [vmem:[%s191 + $0x8] sm:$0xff] %v231
        %248 = vst [vmem:[%s191 + $0x10] sm:$0xff] %v232
        %249 = vst [vmem:[%s191 + $0x18] sm:$0xff] %v233
        %250 = vst [vmem:[%s191 + $0x20] sm:$0xff] %v234
        %251 = vst [vmem:[%s191 + $0x28] sm:$0xff] %v235
        %252 = vst [vmem:[%s191 + $0x30] sm:$0xff] %v236
        %253 = vst [vmem:[%s191 + $0x38] sm:$0xff] %v237
        %254 = vst [vmem:[%s191 + $0x40] sm:$0xff] %v238
        %255 = vst [vmem:[%s191 + $0x48] sm:$0xff] %v239
        %256 = vst [vmem:[%s191 + $0x50] sm:$0xff] %v240
        %257 = vst [vmem:[%s191 + $0x58] sm:$0xff] %v241
        %258 = vst [vmem:[%s191 + $0x60] sm:$0xff] %v242
        %259 = vst [vmem:[%s191 + $0x68] sm:$0xff] %v243
        %260 = vst [vmem:[%s191 + $0x70] sm:$0xff] %v244
        %261 = vst [vmem:[%s191 + $0x78] sm:$0xff] %v245
        %s262 = sand.u32 %s98, 1
        %s263 = scalar_lea.sflag [#allocation6], %s262
        %s264 = sand.u32 %s98, 1
        %s265 = smul.addr %s264, 128
        %s266 = scalar_lea.vmem [#allocation7], %s265
        // Predicated region
        $region37: #{tpu_custom_call.1} parent=31 // pred_check
          %p267 = pneg %p108
        $region38: #{tpu_custom_call.1} parent=31 // pred_check_branch
          %269 = sbr.rel (%p267) target = $region40
        $region39: #{tpu_custom_call.1} parent=31 // pred_region
          %s270 = smul.u32 4, %s22
          %s272 = ssub.s32 2048, 2048
          %273 = vsyncadd %s263, %s272
          %s274 = smul.addr %s270, 4
          %s275 = smul.addr %s274, 128
          %s276 = scalar_lea.hbm %s3, %s275
          %s277 = sshll.u32 %s266, 4
          %s278 = int_to_ptr.vmem [resolvable:$true] %s277
          %283 = dma.vmem_to_hbm [thread:$0]  %s278, 2048, %s276, %s263, 512, 512, 32
        $region40: #{tpu_custom_call.1} parent=31 // pred_fallthru
          _
      $region32: #{tpu_custom_call.1} parent=5 // pred_fallthru
        _
      %p284 = scmp.le.s32.totalorder 2, %s17
      // Predicated region
      $region41: #{tpu_custom_call.1} parent=5 // pred_check
        %p285 = pneg %p284
      $region42: #{tpu_custom_call.1} parent=5 // pred_check_branch
        %287 = sbr.rel (%p285) target = $region44
      $region43: #{tpu_custom_call.1} parent=5 // pred_region
        %s288 = ssub.s32 %s17, 2
        // Predicated region
        $region45: #{tpu_custom_call.1} parent=43 // pred_check
          %p289 = pneg %p114
        $region46: #{tpu_custom_call.1} parent=43 // pred_check_branch
          %291 = sbr.rel (%p289) target = $region48
        $region47: #{tpu_custom_call.1} parent=43 // pred_region
          %s292 = sand.u32 %s99, 1
          %s293 = scalar_lea.sflag [#allocation6], %s292
          %s294 = sand.u32 %s99, 1
          %s295 = smul.addr %s294, 128
          %s296 = scalar_lea.vmem [#allocation7], %s295
          %297 = dma.done %s293, 2048
        $region48: #{tpu_custom_call.1} parent=43 // pred_fallthru
          _
      $region44: #{tpu_custom_call.1} parent=5 // pred_fallthru
        _
    $region6: #{tpu_custom_call.1} parent=1 // loop_footer
      %s21 = sadd.s32 1, %s17
    $region7: #{tpu_custom_call.1} parent=1 // loop_footer_branch
      %16 = sbr.rel target = $region3
    $region8: #{tpu_custom_call.1} parent=1 // loop_exit
      _
    %298 = vsyncpa [#allocation5], 1
    %s299 = scalar_lea.sflag [#allocation5], 1
    %300 = vsyncpa %s299, 1
    %301 = vsyncpa [#allocation6], 1
    %s302 = scalar_lea.sflag [#allocation6], 1
    %303 = vsyncpa %s302, 1

</llo_original>
